<compile_context>
chip_gen: v5e
topology: v5e:2x2
jax: 0.10.0
libtpu: 0.0.40
codegen_flags: <defaults>
</compile_context>

<pallas_src>
import math

import jax
import jax.numpy as jnp
import numpy as np
from jax.experimental import pallas as pl
from jax.experimental.pallas import tpu as pltpu


# ----------------------------------------------------------------------------
# Deterministic filter constants (reproduce get_gaussian_kernel /
# get_sobel_kernel / get_thin_kernels with the module's default arguments).
# ----------------------------------------------------------------------------
def _gaussian_1d(k=3, mu=0.0, sigma=1.0):
    # With mu=0 the reference 2D gaussian exp(-(x^2+y^2)/2s^2)/norm is exactly
    # outer(g, g) with g the normalized 1D gaussian below (separable).
    lin = np.linspace(-1.0, 1.0, k)
    a = np.exp(-((lin - mu) ** 2) / (2.0 * sigma ** 2))
    return a / a.sum()


_G1D = _gaussian_1d()
GAUSS_EDGE = float(_G1D[0])
GAUSS_CENTER = float(_G1D[1])

# The reference sobel equals outer([0.5, 1, 0.5], [-1, 0, 1]); sobel_y is its
# transpose -- both separable (smoothing x central difference).

# Orientation binning: reference positive_idx%4 == round(atan(gy/gx)*8/pi)%4.
# Bin boundaries expressed in tan-space (no atan needed inside the kernel):
TAN_1 = math.tan(1.0 * math.pi / 16.0)
TAN_3 = math.tan(3.0 * math.pi / 16.0)
TAN_5 = math.tan(5.0 * math.pi / 16.0)
TAN_7 = math.tan(7.0 * math.pi / 16.0)


def _physical_vmem_bytes():
    try:
        v = getattr(pltpu.get_tpu_info(), "vmem_capacity_bytes", None)
        if v:
            return int(v)
    except Exception:
        pass
    return 64 * 1024 * 1024          # conservative fallback (v7x per-core VMEM)


# ----------------------------------------------------------------------------
# Wrapper building the fused kernel.
# ----------------------------------------------------------------------------
def canny_filter(img):
    """JAX/Pallas equivalent of CannyFilter().forward(img) with default args."""
    B, C, H, W = img.shape
    img = img.astype(jnp.float32)

    # Lane/sublane padding (W is the lane dim).  If it adds >=1 zero row/col it
    # also serves as the convolution zero padding for that dimension.
    Hp = ((H + 7) // 8) * 8
    Wp = ((W + 127) // 128) * 128
    ROW_PAD = Hp > H
    COL_PAD = Wp > W
    img_p = img
    if ROW_PAD or COL_PAD:
        img_p = jnp.pad(img, ((0, 0), (0, 0), (0, Hp - H), (0, Wp - W)))

    inv_c = 1.0 / float(C)

    def kernel(img_ref, blur_ref, gx_ref, gy_ref, gm_ref, thin_ref):
        c = pl.program_id(1)

        # ---- boundary masks only for dims WITHOUT a physical zero-pad border
        if ROW_PAD:
            row_lo = row_hi = None
        else:
            ri = jax.lax.broadcasted_iota(jnp.int32, (Hp, Wp), 0)
            row_lo = (ri >= 1).astype(jnp.float32)      # row i-1 readable
            row_hi = (ri < H - 1).astype(jnp.float32)   # row i+1 readable
        if COL_PAD:
            col_lo = col_hi = None
        else:
            ci = jax.lax.broadcasted_iota(jnp.int32, (Hp, Wp), 1)
            col_lo = (ci >= 1).astype(jnp.float32)
            col_hi = (ci < W - 1).astype(jnp.float32)

        # Mask that zeroes the physical pad region of *derived* planes so that
        # the mask-free rolls below keep exact zero-padding semantics.
        if ROW_PAD or COL_PAD:
            cond = None
            if ROW_PAD:
                cond = jax.lax.broadcasted_iota(jnp.int32, (Hp, Wp), 0) < H
            if COL_PAD:
                cc = jax.lax.broadcasted_iota(jnp.int32, (Hp, Wp), 1) < W
                cond = cc if cond is None else (cond & cc)
            valid = cond.astype(jnp.float32)
            clip = lambda x: x * valid
        else:
            clip = lambda x: x

        def shift_r(x, a):   # y[i, j] = x[i+a, j], zero padded; a in {-1, +1}
            y = pltpu.roll(x, shift=(-a) % Hp, axis=0)
            m = row_lo if a < 0 else row_hi
            return y if m is None else y * m

        def shift_c(x, b):   # y[i, j] = x[i, j+b], zero padded; b in {-1, +1}
            y = pltpu.roll(x, shift=(-b) % Wp, axis=1)
            m = col_lo if b < 0 else col_hi
            return y if m is None else y * m

        # ---- per-channel separable gaussian blur (== nn.Conv2d 3x3, pad=1)
        x = img_ref[0, 0, :, :]
        t = GAUSS_EDGE * (shift_r(x, -1) + shift_r(x, 1)) + GAUSS_CENTER * x
        blur = GAUSS_EDGE * (shift_c(t, -1) + shift_c(t, 1)) + GAUSS_CENTER * t
        blur_ref[0, 0, :, :] = blur

        # ---- separable sobel on the (zero-padded) blurred plane; row shifts
        # ---- of `blur` are shared between sobel-x and sobel-y.
        blur_z = clip(blur)                     # pad region must read as zero
        b_up = shift_r(blur_z, -1)              # blur[i-1, j]
        b_dn = shift_r(blur_z, 1)               # blur[i+1, j]
        sx_col = 0.5 * (b_up + b_dn) + blur_z               # rows [0.5, 1, 0.5]
        sy_col = b_dn - b_up                                 # rows [-1, 0, 1]
        sx = shift_c(sx_col, 1) - shift_c(sx_col, -1)        # cols [-1, 0, 1]
        sy = 0.5 * (shift_c(sy_col, -1) + shift_c(sy_col, 1)) + sy_col

        # ---- accumulate channel sums directly in the resident output blocks
        @pl.when(c == 0)
        def _init():
            gx_ref[0, 0, :, :] = sx
            gy_ref[0, 0, :, :] = sy

        @pl.when(c > 0)
        def _acc():
            gx_ref[0, 0, :, :] = gx_ref[0, 0, :, :] + sx
            gy_ref[0, 0, :, :] = gy_ref[0, 0, :, :] + sy

        # ---- last channel: normalize, gradient magnitude + fused NMS.
        @pl.when(c == C - 1)
        def _finalize():
            gx = gx_ref[0, 0, :, :] * inv_c
            gy = gy_ref[0, 0, :, :] * inv_c
            gx_ref[0, 0, :, :] = gx
            gy_ref[0, 0, :, :] = gy
            gm = jnp.sqrt(gx * gx + gy * gy)
            gm_ref[0, 0, :, :] = gm
            gm_z = clip(gm)                     # pad region must read as zero

            # Shared neighbour shifts: 4 cardinal rolls, diagonals derived with
            # one extra lane roll each (8 rolls total, <=1 mask mul per roll).
            # Per orientation pair only max(n+, n-) is kept alive.
            gm_u = shift_r(gm_z, -1)            # gm[i-1, j]
            gm_d = shift_r(gm_z, 1)             # gm[i+1, j]
            nmax0 = jnp.maximum(shift_c(gm_z, 1), shift_c(gm_z, -1))   # E  / W
            nmax1 = jnp.maximum(shift_c(gm_u, 1), shift_c(gm_d, -1))   # NE / SW
            nmax3 = jnp.maximum(shift_c(gm_u, -1), shift_c(gm_d, 1))   # NW / SE
            nmax2 = jnp.maximum(gm_u, gm_d)                            # N  / S

            # Orientation-pair binning straight from gx/gy (tan thresholds;
            # equals the reference round(atan)*45 binning up to FP ties exactly
            # on the 22.5deg+k*45deg boundaries).
            ax = jnp.abs(gx)
            ay = jnp.abs(gy)
            pos = (gx * gy) > 0.0
            t1 = TAN_1 * ax
            t3 = TAN_3 * ax
            t5 = TAN_5 * ax
            t7 = TAN_7 * ax
            band1 = (ay >= t1) & (ay < t3)
            band3 = (ay >= t5) & (ay < t7)

            # Reference removes a pixel iff min(gm - n+, gm - n-) <= 0 for its
            # orientation pair, i.e. gm <= max(n+, n-).
            sup = ((ay < t1) | (ay >= t7)) & (gm_z <= nmax0)
            sup = sup | (((band1 & pos) | (band3 & ~pos)) & (gm_z <= nmax1))
            sup = sup | (((ay >= t3) & (ay < t5)) & (gm_z <= nmax2))
            sup = sup | (((band1 & ~pos) | (band3 & pos)) & (gm_z <= nmax3))
            thin_ref[0, 0, :, :] = jnp.where(sup, 0.0, gm)

    blk_bc = lambda b, c: (b, c, 0, 0)
    blk_b0 = lambda b, c: (b, 0, 0, 0)

    # VMEM budget: 12 double-buffered pipeline planes + ~14 live finalize
    # temporaries + slack, capped at 85% of this generation's physical VMEM.
    plane = Hp * Wp * 4
    phys = _physical_vmem_bytes()
    need = 26 * plane + (4 << 20)
    vmem_limit = int(max(32 * 1024 * 1024, min(need, int(phys * 0.85))))

    blurred, grad_x, grad_y, grad_mag, thin_edges = pl.pallas_call(
        kernel,
        out_shape=(
            jax.ShapeDtypeStruct((B, C, Hp, Wp), jnp.float32),
            jax.ShapeDtypeStruct((B, 1, Hp, Wp), jnp.float32),
            jax.ShapeDtypeStruct((B, 1, Hp, Wp), jnp.float32),
            jax.ShapeDtypeStruct((B, 1, Hp, Wp), jnp.float32),
            jax.ShapeDtypeStruct((B, 1, Hp, Wp), jnp.float32),
        ),
        grid_spec=pltpu.PrefetchScalarGridSpec(
            num_scalar_prefetch=0,
            grid=(B, C),
            in_specs=[pl.BlockSpec((1, 1, Hp, Wp), blk_bc)],
            out_specs=(
                pl.BlockSpec((1, 1, Hp, Wp), blk_bc),   # blurred
                pl.BlockSpec((1, 1, Hp, Wp), blk_b0),   # grad_x (accumulator)
                pl.BlockSpec((1, 1, Hp, Wp), blk_b0),   # grad_y (accumulator)
                pl.BlockSpec((1, 1, Hp, Wp), blk_b0),   # grad_magnitude
                pl.BlockSpec((1, 1, Hp, Wp), blk_b0),   # thin_edges
            ),
        ),
        compiler_params=pltpu.CompilerParams(
            dimension_semantics=("parallel", "arbitrary"),
            vmem_limit_bytes=vmem_limit,
        ),
    )(img_p)

    # Crop the lane/sublane padding back off.
    blurred = blurred[:, :, :H, :W]
    grad_x = grad_x[:, :, :H, :W]
    grad_y = grad_y[:, :, :H, :W]
    grad_mag = grad_mag[:, :, :H, :W]
    thin_edges = thin_edges[:, :, :H, :W]

    # grad_orientation is a module output: tiny elementwise XLA glue keeping
    # torch.atan(gy/gx) inf/NaN semantics exactly (no reliable Mosaic atan).
    grad_orientation = jnp.arctan(grad_y / grad_x)
    grad_orientation = grad_orientation * (360.0 / math.pi) + 180.0
    grad_orientation = jnp.round(grad_orientation / 45.0) * 45.0

    return blurred, grad_x, grad_y, grad_mag, grad_orientation, thin_edges


if __name__ == "__main__":
    key = jax.random.PRNGKey(0)
    img = jax.random.uniform(key, (2, 4, 16, 16), dtype=jnp.float32)
    outs = jax.jit(canny_filter)(img)
    jax.block_until_ready(outs)
    print("KERNEL_OK")
</pallas_src>

<mosaic_0001>
module attributes {stable_mosaic.version = 11 : i64} {
  func.func @kernel(%arg0: i32, %arg1: i32, %arg2: memref<1x1x16x128xf32, #tpu.memory_space<vmem>>, %arg3: memref<1x1x16x128xf32, #tpu.memory_space<vmem>>, %arg4: memref<1x1x16x128xf32, #tpu.memory_space<vmem>>, %arg5: memref<1x1x16x128xf32, #tpu.memory_space<vmem>>, %arg6: memref<1x1x16x128xf32, #tpu.memory_space<vmem>>, %arg7: memref<1x1x16x128xf32, #tpu.memory_space<vmem>>) attributes {dimension_semantics = [#tpu.dimension_semantics<parallel>, #tpu.dimension_semantics<arbitrary>], iteration_bounds = array<i64: 2, 4>, scalar_prefetch = 0 : i64, scratch_operands = 0 : i64, tpu.core_type = #tpu.core_type<tc>, window_params = [{transform_indices = @transform_0, window_bounds = array<i64: 1, 1, 16, 128>}, {transform_indices = @transform_1, window_bounds = array<i64: 1, 1, 16, 128>}, {transform_indices = @transform_2, window_bounds = array<i64: 1, 1, 16, 128>}, {transform_indices = @transform_3, window_bounds = array<i64: 1, 1, 16, 128>}, {transform_indices = @transform_4, window_bounds = array<i64: 1, 1, 16, 128>}, {transform_indices = @transform_5, window_bounds = array<i64: 1, 1, 16, 128>}]} {
    %0 = tpu.iota {dimensions = array<i32: 0>} : vector<16x128xi32>
    %c1_i32 = arith.constant 1 : i32
    %1 = vector.broadcast %c1_i32 : i32 to vector<16x128xi32>
    %2 = arith.cmpi sge, %0, %1 : vector<16x128xi32>
    %3 = arith.extui %2 : vector<16x128xi1> to vector<16x128xi32>
    %4 = arith.sitofp %3 : vector<16x128xi32> to vector<16x128xf32>
    %c15_i32 = arith.constant 15 : i32
    %5 = vector.broadcast %c15_i32 : i32 to vector<16x128xi32>
    %6 = arith.cmpi slt, %0, %5 : vector<16x128xi32>
    %7 = arith.extui %6 : vector<16x128xi1> to vector<16x128xi32>
    %8 = arith.sitofp %7 : vector<16x128xi32> to vector<16x128xf32>
    %9 = tpu.iota {dimensions = array<i32: 1>} : vector<16x128xi32>
    %c16_i32 = arith.constant 16 : i32
    %10 = vector.broadcast %c16_i32 : i32 to vector<16x128xi32>
    %11 = arith.cmpi slt, %9, %10 : vector<16x128xi32>
    %12 = arith.extui %11 : vector<16x128xi1> to vector<16x128xi32>
    %13 = arith.sitofp %12 : vector<16x128xi32> to vector<16x128xf32>
    %c0 = arith.constant 0 : index
    %c0_0 = arith.constant 0 : index
    %c0_1 = arith.constant 0 : index
    %c0_2 = arith.constant 0 : index
    %14 = vector.load %arg2[%c0, %c0_0, %c0_1, %c0_2] : memref<1x1x16x128xf32, #tpu.memory_space<vmem>>, vector<1x1x16x128xf32>
    %15 = vector.shape_cast %14 : vector<1x1x16x128xf32> to vector<16x128xf32>
    %c1_i32_3 = arith.constant 1 : i32
    %16 = tpu.dynamic_rotate %15 by %c1_i32_3 dim 0 : vector<16x128xf32>, i32 -> vector<16x128xf32>
    %17 = arith.mulf %16, %4 : vector<16x128xf32>
    %c15_i32_4 = arith.constant 15 : i32
    %18 = tpu.dynamic_rotate %15 by %c15_i32_4 dim 0 : vector<16x128xf32>, i32 -> vector<16x128xf32>
    %19 = arith.mulf %18, %8 : vector<16x128xf32>
    %20 = arith.addf %17, %19 : vector<16x128xf32>
    %cst = arith.constant 0.274068624 : f32
    %21 = vector.broadcast %cst : f32 to vector<16x128xf32>
    %22 = arith.mulf %21, %20 : vector<16x128xf32>
    %cst_5 = arith.constant 0.451862752 : f32
    %23 = vector.broadcast %cst_5 : f32 to vector<16x128xf32>
    %24 = arith.mulf %23, %15 : vector<16x128xf32>
    %25 = arith.addf %22, %24 : vector<16x128xf32>
    %c1_i32_6 = arith.constant 1 : i32
    %26 = tpu.dynamic_rotate %25 by %c1_i32_6 dim 1 : vector<16x128xf32>, i32 -> vector<16x128xf32>
    %c127_i32 = arith.constant 127 : i32
    %27 = tpu.dynamic_rotate %25 by %c127_i32 dim 1 : vector<16x128xf32>, i32 -> vector<16x128xf32>
    %28 = arith.addf %26, %27 : vector<16x128xf32>
    %cst_7 = arith.constant 0.274068624 : f32
    %29 = vector.broadcast %cst_7 : f32 to vector<16x128xf32>
    %30 = arith.mulf %29, %28 : vector<16x128xf32>
    %cst_8 = arith.constant 0.451862752 : f32
    %31 = vector.broadcast %cst_8 : f32 to vector<16x128xf32>
    %32 = arith.mulf %31, %25 : vector<16x128xf32>
    %33 = arith.addf %30, %32 : vector<16x128xf32>
    %c0_9 = arith.constant 0 : index
    %c0_10 = arith.constant 0 : index
    %c0_11 = arith.constant 0 : index
    %c0_12 = arith.constant 0 : index
    %34 = vector.load %arg3[%c0_9, %c0_10, %c0_11, %c0_12] : memref<1x1x16x128xf32, #tpu.memory_space<vmem>>, vector<1x1x16x128xf32>
    %35 = vector.shape_cast %34 : vector<1x1x16x128xf32> to vector<16x128xf32>
    %36 = vector.shape_cast %33 : vector<16x128xf32> to vector<1x1x16x128xf32>
    tpu.vector_store %arg3[%c0_9, %c0_10, %c0_11, %c0_12], %36 {strides = array<i32>} : memref<1x1x16x128xf32, #tpu.memory_space<vmem>>, vector<1x1x16x128xf32>,
    %37 = arith.mulf %33, %13 : vector<16x128xf32>
    %c1_i32_13 = arith.constant 1 : i32
    %38 = tpu.dynamic_rotate %37 by %c1_i32_13 dim 0 : vector<16x128xf32>, i32 -> vector<16x128xf32>
    %39 = arith.mulf %38, %4 : vector<16x128xf32>
    %c15_i32_14 = arith.constant 15 : i32
    %40 = tpu.dynamic_rotate %37 by %c15_i32_14 dim 0 : vector<16x128xf32>, i32 -> vector<16x128xf32>
    %41 = arith.mulf %40, %8 : vector<16x128xf32>
    %42 = arith.addf %39, %41 : vector<16x128xf32>
    %cst_15 = arith.constant 5.000000e-01 : f32
    %43 = vector.broadcast %cst_15 : f32 to vector<16x128xf32>
    %44 = arith.mulf %43, %42 : vector<16x128xf32>
    %45 = arith.addf %44, %37 : vector<16x128xf32>
    %46 = arith.subf %41, %39 : vector<16x128xf32>
    %c127_i32_16 = arith.constant 127 : i32
    %47 = tpu.dynamic_rotate %45 by %c127_i32_16 dim 1 : vector<16x128xf32>, i32 -> vector<16x128xf32>
    %c1_i32_17 = arith.constant 1 : i32
    %48 = tpu.dynamic_rotate %45 by %c1_i32_17 dim 1 : vector<16x128xf32>, i32 -> vector<16x128xf32>
    %49 = arith.subf %47, %48 : vector<16x128xf32>
    %c1_i32_18 = arith.constant 1 : i32
    %50 = tpu.dynamic_rotate %46 by %c1_i32_18 dim 1 : vector<16x128xf32>, i32 -> vector<16x128xf32>
    %c127_i32_19 = arith.constant 127 : i32
    %51 = tpu.dynamic_rotate %46 by %c127_i32_19 dim 1 : vector<16x128xf32>, i32 -> vector<16x128xf32>
    %52 = arith.addf %50, %51 : vector<16x128xf32>
    %cst_20 = arith.constant 5.000000e-01 : f32
    %53 = vector.broadcast %cst_20 : f32 to vector<16x128xf32>
    %54 = arith.mulf %53, %52 : vector<16x128xf32>
    %55 = arith.addf %54, %46 : vector<16x128xf32>
    %c0_i32 = arith.constant 0 : i32
    %56 = arith.cmpi eq, %arg1, %c0_i32 : i32
    %57 = arith.extui %56 : i1 to i32
    %c0_i32_21 = arith.constant 0 : i32
    %58 = arith.cmpi ne, %57, %c0_i32_21 : i32
    scf.if %58 {
      %c0_25 = arith.constant 0 : index
      %c0_26 = arith.constant 0 : index
      %c0_27 = arith.constant 0 : index
      %c0_28 = arith.constant 0 : index
      %65 = vector.load %arg4[%c0_25, %c0_26, %c0_27, %c0_28] : memref<1x1x16x128xf32, #tpu.memory_space<vmem>>, vector<1x1x16x128xf32>
      %66 = vector.shape_cast %65 : vector<1x1x16x128xf32> to vector<16x128xf32>
      %67 = vector.shape_cast %49 : vector<16x128xf32> to vector<1x1x16x128xf32>
      tpu.vector_store %arg4[%c0_25, %c0_26, %c0_27, %c0_28], %67 {strides = array<i32>} : memref<1x1x16x128xf32, #tpu.memory_space<vmem>>, vector<1x1x16x128xf32>,
      %c0_29 = arith.constant 0 : index
      %c0_30 = arith.constant 0 : index
      %c0_31 = arith.constant 0 : index
      %c0_32 = arith.constant 0 : index
      %68 = vector.load %arg5[%c0_29, %c0_30, %c0_31, %c0_32] : memref<1x1x16x128xf32, #tpu.memory_space<vmem>>, vector<1x1x16x128xf32>
      %69 = vector.shape_cast %68 : vector<1x1x16x128xf32> to vector<16x128xf32>
      %70 = vector.shape_cast %55 : vector<16x128xf32> to vector<1x1x16x128xf32>
      tpu.vector_store %arg5[%c0_29, %c0_30, %c0_31, %c0_32], %70 {strides = array<i32>} : memref<1x1x16x128xf32, #tpu.memory_space<vmem>>, vector<1x1x16x128xf32>,
    } else {
    }
    %c0_i32_22 = arith.constant 0 : i32
    %59 = arith.cmpi sgt, %arg1, %c0_i32_22 : i32
    %60 = arith.extui %59 : i1 to i32
    %c0_i32_23 = arith.constant 0 : i32
    %61 = arith.cmpi ne, %60, %c0_i32_23 : i32
    scf.if %61 {
      %c0_25 = arith.constant 0 : index
      %c0_26 = arith.constant 0 : index
      %c0_27 = arith.constant 0 : index
      %c0_28 = arith.constant 0 : index
      %65 = vector.load %arg4[%c0_25, %c0_26, %c0_27, %c0_28] : memref<1x1x16x128xf32, #tpu.memory_space<vmem>>, vector<1x1x16x128xf32>
      %66 = vector.shape_cast %65 : vector<1x1x16x128xf32> to vector<16x128xf32>
      %67 = arith.addf %66, %49 : vector<16x128xf32>
      %c0_29 = arith.constant 0 : index
      %c0_30 = arith.constant 0 : index
      %c0_31 = arith.constant 0 : index
      %c0_32 = arith.constant 0 : index
      %68 = vector.load %arg4[%c0_29, %c0_30, %c0_31, %c0_32] : memref<1x1x16x128xf32, #tpu.memory_space<vmem>>, vector<1x1x16x128xf32>
      %69 = vector.shape_cast %68 : vector<1x1x16x128xf32> to vector<16x128xf32>
      %70 = vector.shape_cast %67 : vector<16x128xf32> to vector<1x1x16x128xf32>
      tpu.vector_store %arg4[%c0_29, %c0_30, %c0_31, %c0_32], %70 {strides = array<i32>} : memref<1x1x16x128xf32, #tpu.memory_space<vmem>>, vector<1x1x16x128xf32>,
      %c0_33 = arith.constant 0 : index
      %c0_34 = arith.constant 0 : index
      %c0_35 = arith.constant 0 : index
      %c0_36 = arith.constant 0 : index
      %71 = vector.load %arg5[%c0_33, %c0_34, %c0_35, %c0_36] : memref<1x1x16x128xf32, #tpu.memory_space<vmem>>, vector<1x1x16x128xf32>
      %72 = vector.shape_cast %71 : vector<1x1x16x128xf32> to vector<16x128xf32>
      %73 = arith.addf %72, %55 : vector<16x128xf32>
      %c0_37 = arith.constant 0 : index
      %c0_38 = arith.constant 0 : index
      %c0_39 = arith.constant 0 : index
      %c0_40 = arith.constant 0 : index
      %74 = vector.load %arg5[%c0_37, %c0_38, %c0_39, %c0_40] : memref<1x1x16x128xf32, #tpu.memory_space<vmem>>, vector<1x1x16x128xf32>
      %75 = vector.shape_cast %74 : vector<1x1x16x128xf32> to vector<16x128xf32>
      %76 = vector.shape_cast %73 : vector<16x128xf32> to vector<1x1x16x128xf32>
      tpu.vector_store %arg5[%c0_37, %c0_38, %c0_39, %c0_40], %76 {strides = array<i32>} : memref<1x1x16x128xf32, #tpu.memory_space<vmem>>, vector<1x1x16x128xf32>,
    } else {
    }
    %c3_i32 = arith.constant 3 : i32
    %62 = arith.cmpi eq, %arg1, %c3_i32 : i32
    %63 = arith.extui %62 : i1 to i32
    %c0_i32_24 = arith.constant 0 : i32
    %64 = arith.cmpi ne, %63, %c0_i32_24 : i32
    scf.if %64 {
      %c0_25 = arith.constant 0 : index
      %c0_26 = arith.constant 0 : index
      %c0_27 = arith.constant 0 : index
      %c0_28 = arith.constant 0 : index
      %65 = vector.load %arg4[%c0_25, %c0_26, %c0_27, %c0_28] : memref<1x1x16x128xf32, #tpu.memory_space<vmem>>, vector<1x1x16x128xf32>
      %66 = vector.shape_cast %65 : vector<1x1x16x128xf32> to vector<16x128xf32>
      %cst_29 = arith.constant 2.500000e-01 : f32
      %67 = vector.broadcast %cst_29 : f32 to vector<16x128xf32>
      %68 = arith.mulf %66, %67 : vector<16x128xf32>
      %c0_30 = arith.constant 0 : index
      %c0_31 = arith.constant 0 : index
      %c0_32 = arith.constant 0 : index
      %c0_33 = arith.constant 0 : index
      %69 = vector.load %arg5[%c0_30, %c0_31, %c0_32, %c0_33] : memref<1x1x16x128xf32, #tpu.memory_space<vmem>>, vector<1x1x16x128xf32>
      %70 = vector.shape_cast %69 : vector<1x1x16x128xf32> to vector<16x128xf32>
      %cst_34 = arith.constant 2.500000e-01 : f32
      %71 = vector.broadcast %cst_34 : f32 to vector<16x128xf32>
      %72 = arith.mulf %70, %71 : vector<16x128xf32>
      %c0_35 = arith.constant 0 : index
      %c0_36 = arith.constant 0 : index
      %c0_37 = arith.constant 0 : index
      %c0_38 = arith.constant 0 : index
      %73 = vector.load %arg4[%c0_35, %c0_36, %c0_37, %c0_38] : memref<1x1x16x128xf32, #tpu.memory_space<vmem>>, vector<1x1x16x128xf32>
      %74 = vector.shape_cast %73 : vector<1x1x16x128xf32> to vector<16x128xf32>
      %75 = vector.shape_cast %68 : vector<16x128xf32> to vector<1x1x16x128xf32>
      tpu.vector_store %arg4[%c0_35, %c0_36, %c0_37, %c0_38], %75 {strides = array<i32>} : memref<1x1x16x128xf32, #tpu.memory_space<vmem>>, vector<1x1x16x128xf32>,
      %c0_39 = arith.constant 0 : index
      %c0_40 = arith.constant 0 : index
      %c0_41 = arith.constant 0 : index
      %c0_42 = arith.constant 0 : index
      %76 = vector.load %arg5[%c0_39, %c0_40, %c0_41, %c0_42] : memref<1x1x16x128xf32, #tpu.memory_space<vmem>>, vector<1x1x16x128xf32>
      %77 = vector.shape_cast %76 : vector<1x1x16x128xf32> to vector<16x128xf32>
      %78 = vector.shape_cast %72 : vector<16x128xf32> to vector<1x1x16x128xf32>
      tpu.vector_store %arg5[%c0_39, %c0_40, %c0_41, %c0_42], %78 {strides = array<i32>} : memref<1x1x16x128xf32, #tpu.memory_space<vmem>>, vector<1x1x16x128xf32>,
      %79 = arith.mulf %68, %68 : vector<16x128xf32>
      %80 = arith.mulf %72, %72 : vector<16x128xf32>
      %81 = arith.addf %79, %80 : vector<16x128xf32>
      %82 = math.sqrt %81 : vector<16x128xf32>
      %c0_43 = arith.constant 0 : index
      %c0_44 = arith.constant 0 : index
      %c0_45 = arith.constant 0 : index
      %c0_46 = arith.constant 0 : index
      %83 = vector.load %arg6[%c0_43, %c0_44, %c0_45, %c0_46] : memref<1x1x16x128xf32, #tpu.memory_space<vmem>>, vector<1x1x16x128xf32>
      %84 = vector.shape_cast %83 : vector<1x1x16x128xf32> to vector<16x128xf32>
      %85 = vector.shape_cast %82 : vector<16x128xf32> to vector<1x1x16x128xf32>
      tpu.vector_store %arg6[%c0_43, %c0_44, %c0_45, %c0_46], %85 {strides = array<i32>} : memref<1x1x16x128xf32, #tpu.memory_space<vmem>>, vector<1x1x16x128xf32>,
      %86 = arith.mulf %82, %13 : vector<16x128xf32>
      %c1_i32_47 = arith.constant 1 : i32
      %87 = tpu.dynamic_rotate %86 by %c1_i32_47 dim 0 : vector<16x128xf32>, i32 -> vector<16x128xf32>
      %88 = arith.mulf %87, %4 : vector<16x128xf32>
      %c15_i32_48 = arith.constant 15 : i32
      %89 = tpu.dynamic_rotate %86 by %c15_i32_48 dim 0 : vector<16x128xf32>, i32 -> vector<16x128xf32>
      %90 = arith.mulf %89, %8 : vector<16x128xf32>
      %c127_i32_49 = arith.constant 127 : i32
      %91 = tpu.dynamic_rotate %86 by %c127_i32_49 dim 1 : vector<16x128xf32>, i32 -> vector<16x128xf32>
      %c1_i32_50 = arith.constant 1 : i32
      %92 = tpu.dynamic_rotate %86 by %c1_i32_50 dim 1 : vector<16x128xf32>, i32 -> vector<16x128xf32>
      %93 = arith.maximumf %91, %92 : vector<16x128xf32>
      %c127_i32_51 = arith.constant 127 : i32
      %94 = tpu.dynamic_rotate %88 by %c127_i32_51 dim 1 : vector<16x128xf32>, i32 -> vector<16x128xf32>
      %c1_i32_52 = arith.constant 1 : i32
      %95 = tpu.dynamic_rotate %90 by %c1_i32_52 dim 1 : vector<16x128xf32>, i32 -> vector<16x128xf32>
      %96 = arith.maximumf %94, %95 : vector<16x128xf32>
      %c1_i32_53 = arith.constant 1 : i32
      %97 = tpu.dynamic_rotate %88 by %c1_i32_53 dim 1 : vector<16x128xf32>, i32 -> vector<16x128xf32>
      %c127_i32_54 = arith.constant 127 : i32
      %98 = tpu.dynamic_rotate %90 by %c127_i32_54 dim 1 : vector<16x128xf32>, i32 -> vector<16x128xf32>
      %99 = arith.maximumf %97, %98 : vector<16x128xf32>
      %100 = arith.maximumf %88, %90 : vector<16x128xf32>
      %101 = math.absf %68 : vector<16x128xf32>
      %102 = math.absf %72 : vector<16x128xf32>
      %103 = arith.mulf %68, %72 : vector<16x128xf32>
      %cst_55 = arith.constant 0.000000e+00 : f32
      %104 = vector.broadcast %cst_55 : f32 to vector<16x128xf32>
      %105 = arith.cmpf ogt, %103, %104 : vector<16x128xf32>
      %cst_56 = arith.constant 0.198912367 : f32
      %106 = vector.broadcast %cst_56 : f32 to vector<16x128xf32>
      %107 = arith.mulf %106, %101 : vector<16x128xf32>
      %cst_57 = arith.constant 0.668178617 : f32
      %108 = vector.broadcast %cst_57 : f32 to vector<16x128xf32>
      %109 = arith.mulf %108, %101 : vector<16x128xf32>
      %cst_58 = arith.constant 1.49660575 : f32
      %110 = vector.broadcast %cst_58 : f32 to vector<16x128xf32>
      %111 = arith.mulf %110, %101 : vector<16x128xf32>
      %cst_59 = arith.constant 5.02733946 : f32
      %112 = vector.broadcast %cst_59 : f32 to vector<16x128xf32>
      %113 = arith.mulf %112, %101 : vector<16x128xf32>
      %114 = arith.cmpf oge, %102, %107 : vector<16x128xf32>
      %115 = arith.cmpf olt, %102, %109 : vector<16x128xf32>
      %116 = arith.andi %114, %115 : vector<16x128xi1>
      %117 = arith.cmpf oge, %102, %111 : vector<16x128xf32>
      %118 = arith.cmpf olt, %102, %113 : vector<16x128xf32>
      %119 = arith.andi %117, %118 : vector<16x128xi1>
      %120 = arith.cmpf olt, %102, %107 : vector<16x128xf32>
      %121 = arith.cmpf oge, %102, %113 : vector<16x128xf32>
      %122 = arith.ori %120, %121 : vector<16x128xi1>
      %123 = arith.cmpf ole, %86, %93 : vector<16x128xf32>
      %124 = arith.andi %122, %123 : vector<16x128xi1>
      %125 = arith.andi %116, %105 : vector<16x128xi1>
      %cst_60 = arith.constant dense<true> : vector<16x128xi1>
      %126 = arith.xori %105, %cst_60 : vector<16x128xi1>
      %127 = arith.andi %119, %126 : vector<16x128xi1>
      %128 = arith.ori %125, %127 : vector<16x128xi1>
      %129 = arith.cmpf ole, %86, %96 : vector<16x128xf32>
      %130 = arith.andi %128, %129 : vector<16x128xi1>
      %131 = arith.ori %124, %130 : vector<16x128xi1>
      %132 = arith.cmpf oge, %102, %109 : vector<16x128xf32>
      %133 = arith.cmpf olt, %102, %111 : vector<16x128xf32>
      %134 = arith.andi %132, %133 : vector<16x128xi1>
      %135 = arith.cmpf ole, %86, %100 : vector<16x128xf32>
      %136 = arith.andi %134, %135 : vector<16x128xi1>
      %137 = arith.ori %131, %136 : vector<16x128xi1>
      %cst_61 = arith.constant dense<true> : vector<16x128xi1>
      %138 = arith.xori %105, %cst_61 : vector<16x128xi1>
      %139 = arith.andi %116, %138 : vector<16x128xi1>
      %140 = arith.andi %119, %105 : vector<16x128xi1>
      %141 = arith.ori %139, %140 : vector<16x128xi1>
      %142 = arith.cmpf ole, %86, %99 : vector<16x128xf32>
      %143 = arith.andi %141, %142 : vector<16x128xi1>
      %144 = arith.ori %137, %143 : vector<16x128xi1>
      %cst_62 = arith.constant 0.000000e+00 : f32
      %145 = vector.broadcast %cst_62 : f32 to vector<16x128xf32>
      %146 = arith.select %144, %145, %82 : vector<16x128xi1>, vector<16x128xf32>
      %c0_63 = arith.constant 0 : index
      %c0_64 = arith.constant 0 : index
      %c0_65 = arith.constant 0 : index
      %c0_66 = arith.constant 0 : index
      %147 = vector.load %arg7[%c0_63, %c0_64, %c0_65, %c0_66] : memref<1x1x16x128xf32, #tpu.memory_space<vmem>>, vector<1x1x16x128xf32>
      %148 = vector.shape_cast %147 : vector<1x1x16x128xf32> to vector<16x128xf32>
      %149 = vector.shape_cast %146 : vector<16x128xf32> to vector<1x1x16x128xf32>
      tpu.vector_store %arg7[%c0_63, %c0_64, %c0_65, %c0_66], %149 {strides = array<i32>} : memref<1x1x16x128xf32, #tpu.memory_space<vmem>>, vector<1x1x16x128xf32>,
    } else {
    }
    return
  }
  func.func @transform_0(%arg0: i32, %arg1: i32) -> (i32, i32, i32, i32) {
    %c0_i32 = arith.constant 0 : i32
    %c0_i32_0 = arith.constant 0 : i32
    %c0_i32_1 = arith.constant 0 : i32
    return %arg0, %arg1, %c0_i32, %c0_i32_0 : i32, i32, i32, i32
  }
  func.func @transform_1(%arg0: i32, %arg1: i32) -> (i32, i32, i32, i32) {
    %c0_i32 = arith.constant 0 : i32
    %c0_i32_0 = arith.constant 0 : i32
    %c0_i32_1 = arith.constant 0 : i32
    return %arg0, %arg1, %c0_i32, %c0_i32_0 : i32, i32, i32, i32
  }
  func.func @transform_2(%arg0: i32, %arg1: i32) -> (i32, i32, i32, i32) {
    %c0_i32 = arith.constant 0 : i32
    %c0_i32_0 = arith.constant 0 : i32
    %c0_i32_1 = arith.constant 0 : i32
    %c0_i32_2 = arith.constant 0 : i32
    return %arg0, %c0_i32, %c0_i32_0, %c0_i32_1 : i32, i32, i32, i32
  }
  func.func @transform_3(%arg0: i32, %arg1: i32) -> (i32, i32, i32, i32) {
    %c0_i32 = arith.constant 0 : i32
    %c0_i32_0 = arith.constant 0 : i32
    %c0_i32_1 = arith.constant 0 : i32
    %c0_i32_2 = arith.constant 0 : i32
    return %arg0, %c0_i32, %c0_i32_0, %c0_i32_1 : i32, i32, i32, i32
  }
  func.func @transform_4(%arg0: i32, %arg1: i32) -> (i32, i32, i32, i32) {
    %c0_i32 = arith.constant 0 : i32
    %c0_i32_0 = arith.constant 0 : i32
    %c0_i32_1 = arith.constant 0 : i32
    %c0_i32_2 = arith.constant 0 : i32
    return %arg0, %c0_i32, %c0_i32_0, %c0_i32_1 : i32, i32, i32, i32
  }
  func.func @transform_5(%arg0: i32, %arg1: i32) -> (i32, i32, i32, i32) {
    %c0_i32 = arith.constant 0 : i32
    %c0_i32_0 = arith.constant 0 : i32
    %c0_i32_1 = arith.constant 0 : i32
    %c0_i32_2 = arith.constant 0 : i32
    return %arg0, %c0_i32, %c0_i32_0, %c0_i32_1 : i32, i32, i32, i32
  }
}

</mosaic_0001>

<llo_original>
// kernel: canny_filter.1
$region0: #{canny_filter.1}
  #allocation0 [shape = 'u32[]', space=smem, size = 0x4, offset = 0x4, fixed_abs, tag = 'smem constant byte address 0x4 - core index']
  #allocation1 [shape = 'u32[72,128]{1,0:T(1,128)}', space=vmem, size = 0x9000, scoped, tag = 'internal scratch']
  %s0 = inlined_call_operand.vmem [shape: f32[2,4,16,128], index: 0, kind: input, shape index: {}]
  %s1 = inlined_call_operand.hbm [shape: f32[2,4,16,128], index: 1, kind: output, shape index: {0}]
  %s2 = inlined_call_operand.vmem [shape: f32[2,1,16,128], index: 2, kind: output, shape index: {1}]
  %s3 = inlined_call_operand.vmem [shape: f32[2,1,16,128], index: 3, kind: output, shape index: {2}]
  %s4 = inlined_call_operand.hbm [shape: f32[2,1,16,128], index: 4, kind: output, shape index: {3}]
  %s5 = inlined_call_operand.hbm [shape: f32[2,1,16,128], index: 5, kind: output, shape index: {4}]
  %6 = xla_tuple %s1, %s2, %s3, %s4, %s5
  %s7 = sld [smem:[#allocation0]]
  $region81: #{canny_filter.1} parent=0
    _
  %s9 = ssub.s32 1, %s7
  %s10 = scalar_select 0, %s9, %s7
  $region1: #{canny_filter.1} parent=0
    #allocation2 [shape = 'u8[16384]{0}', space=vmem, size = 0x4000, scoped, tag = 'output window, operand 0']
    #allocation3 [shape = 's32[2]{0}', space=sflag, size = 0x8, scoped, tag = 'scoped memory for canny_filter.1']
    #allocation4 [shape = 'u8[16384]{0}', space=vmem, size = 0x4000, scoped, tag = 'output window, operand 3']
    #allocation5 [shape = 's32[2]{0}', space=sflag, size = 0x8, scoped, tag = 'scoped memory for canny_filter.1']
    #allocation6 [shape = 'u8[16384]{0}', space=vmem, size = 0x4000, scoped, tag = 'output window, operand 4']
    %11 = vsyncpa [#allocation3], 0
    %s12 = scalar_lea.sflag [#allocation3], 1
    %13 = vsyncpa %s12, 0
    %14 = vsyncpa [#allocation5], 0
    %s15 = scalar_lea.sflag [#allocation5], 1
    %16 = vsyncpa %s15, 0
    loop: start=0, step=1, limit=10
    $region2: #{canny_filter.1} parent=1 // loop_pre_header
      _
    $region3: #{canny_filter.1} parent=1 // loop_header
      %s18 = sphi 0, %s22
      %p19 = scmp.ge.s32.totalorder %s18, 10
      %s25 = sphi 0, %s37
      %s26 = sphi 0, %s33
      %s27 = sphi 0, %s25
      %s28 = sphi 0, %s26
      %s29 = sphi 0, %s27
      %s30 = sphi 0, %s28
      %s42 = sphi 0, %s44
      %s45 = sphi 0, %s42
      %s46 = sphi 0, %s45
      %s62 = sphi 0, %s46
      %s70 = sphi 0, %s72
      %s73 = sphi 0, %s70
      %s74 = sphi 0, %s73
      %s90 = sphi 0, %s74
      %s96 = sphi 0, %s98
      %s99 = sphi 0, %s96
      %s100 = sphi 0, %s99
      %s116 = sphi 0, %s100
      %s122 = sphi 0, %s124
      %s125 = sphi 0, %s122
      %s126 = sphi 0, %s125
      %s142 = sphi 0, %s126
      %s148 = sphi 0, %s150
      %s151 = sphi 0, %s148
      %s152 = sphi 0, %s151
      %s168 = sphi 0, %s152
      %s174 = sphi 0, %s176
      %s177 = sphi 0, %s174
      %s178 = sphi 0, %s177
      %s194 = sphi 0, %s178
    $region4: #{canny_filter.1} parent=1 // loop_header_branch
      %21 = sbr.rel (%p19) target = $region8
    $region5: #{canny_filter.1} parent=1 // loop_body
      %s23 = ssub.s32 %s18, 1
      %s24 = ssub.s32 %s18, 2
      %s31 = sadd.s32 1, %s26
      %p32 = scmp.ge.s32.totalorder %s31, 4
      %s33 = scalar_select %p32, 0, %s31
      %s34 = sadd.s32 1, %s25
      %s35 = scalar_select %p32, %s34, %s25
      %p36 = scmp.ge.s32.totalorder %s35, 2
      %s37 = scalar_select %p36, 0, %s35
      %s38 = ssub.s32 %s25, %s37
      %s39 = ssub.s32 %s26, %s33
      %s40 = sor.u32 %s38, %s39
      %p41 = scmp.eq.s32.totalorder %s40, 0
      %s43 = sadd.s32 %s42, 1
      %s44 = scalar_select %p41, %s42, %s43
      %p47 = pneg %p41
      %p48 = scmp.eq.s32.totalorder %s18, 7
      %p49 = por %p47, %p48
      %p50 = scmp.ne.s32.totalorder %s42, %s45
      %p51 = scmp.eq.s32.totalorder %s18, 0
      %p52 = por %p50, %p51
      %p53 = scmp.ne.s32.totalorder %s42, %s45
      %p54 = scmp.eq.s32.totalorder %s23, 7
      %p55 = por %p53, %p54
      %p56 = scmp.ne.s32.totalorder %s45, %s46
      %p57 = scmp.eq.s32.totalorder %s23, 0
      %p58 = por %p56, %p57
      %p59 = scmp.ne.s32.totalorder %s45, %s46
      %p60 = scmp.eq.s32.totalorder %s24, 7
      %p61 = por %p59, %p60
      %p63 = scmp.ne.s32.totalorder %s46, %s62
      %p64 = scmp.eq.s32.totalorder %s24, 0
      %p65 = por %p63, %p64
      %s66 = ssub.s32 %s25, %s37
      %s67 = ssub.s32 %s26, %s33
      %s68 = sor.u32 %s66, %s67
      %p69 = scmp.eq.s32.totalorder %s68, 0
      %s71 = sadd.s32 %s70, 1
      %s72 = scalar_select %p69, %s70, %s71
      %p75 = pneg %p69
      %p76 = scmp.eq.s32.totalorder %s18, 7
      %p77 = por %p75, %p76
      %p78 = scmp.ne.s32.totalorder %s70, %s73
      %p79 = scmp.eq.s32.totalorder %s18, 0
      %p80 = por %p78, %p79
      %p81 = scmp.ne.s32.totalorder %s70, %s73
      %p82 = scmp.eq.s32.totalorder %s23, 7
      %p83 = por %p81, %p82
      %p84 = scmp.ne.s32.totalorder %s73, %s74
      %p85 = scmp.eq.s32.totalorder %s23, 0
      %p86 = por %p84, %p85
      %p87 = scmp.ne.s32.totalorder %s73, %s74
      %p88 = scmp.eq.s32.totalorder %s24, 7
      %p89 = por %p87, %p88
      %p91 = scmp.ne.s32.totalorder %s74, %s90
      %p92 = scmp.eq.s32.totalorder %s24, 0
      %p93 = por %p91, %p92
      %s94 = ssub.s32 %s25, %s37
      %p95 = scmp.eq.s32.totalorder %s94, 0
      %s97 = sadd.s32 %s96, 1
      %s98 = scalar_select %p95, %s96, %s97
      %p101 = pneg %p95
      %p102 = scmp.eq.s32.totalorder %s18, 7
      %p103 = por %p101, %p102
      %p104 = scmp.ne.s32.totalorder %s96, %s99
      %p105 = scmp.eq.s32.totalorder %s18, 0
      %p106 = por %p104, %p105
      %p107 = scmp.ne.s32.totalorder %s96, %s99
      %p108 = scmp.eq.s32.totalorder %s23, 7
      %p109 = por %p107, %p108
      %p110 = scmp.ne.s32.totalorder %s99, %s100
      %p111 = scmp.eq.s32.totalorder %s23, 0
      %p112 = por %p110, %p111
      %p113 = scmp.ne.s32.totalorder %s99, %s100
      %p114 = scmp.eq.s32.totalorder %s24, 7
      %p115 = por %p113, %p114
      %p117 = scmp.ne.s32.totalorder %s100, %s116
      %p118 = scmp.eq.s32.totalorder %s24, 0
      %p119 = por %p117, %p118
      %s120 = ssub.s32 %s25, %s37
      %p121 = scmp.eq.s32.totalorder %s120, 0
      %s123 = sadd.s32 %s122, 1
      %s124 = scalar_select %p121, %s122, %s123
      %p127 = pneg %p121
      %p128 = scmp.eq.s32.totalorder %s18, 7
      %p129 = por %p127, %p128
      %p130 = scmp.ne.s32.totalorder %s122, %s125
      %p131 = scmp.eq.s32.totalorder %s18, 0
      %p132 = por %p130, %p131
      %p133 = scmp.ne.s32.totalorder %s122, %s125
      %p134 = scmp.eq.s32.totalorder %s23, 7
      %p135 = por %p133, %p134
      %p136 = scmp.ne.s32.totalorder %s125, %s126
      %p137 = scmp.eq.s32.totalorder %s23, 0
      %p138 = por %p136, %p137
      %p139 = scmp.ne.s32.totalorder %s125, %s126
      %p140 = scmp.eq.s32.totalorder %s24, 7
      %p141 = por %p139, %p140
      %p143 = scmp.ne.s32.totalorder %s126, %s142
      %p144 = scmp.eq.s32.totalorder %s24, 0
      %p145 = por %p143, %p144
      %s146 = ssub.s32 %s25, %s37
      %p147 = scmp.eq.s32.totalorder %s146, 0
      %s149 = sadd.s32 %s148, 1
      %s150 = scalar_select %p147, %s148, %s149
      %p153 = pneg %p147
      %p154 = scmp.eq.s32.totalorder %s18, 7
      %p155 = por %p153, %p154
      %p156 = scmp.ne.s32.totalorder %s148, %s151
      %p157 = scmp.eq.s32.totalorder %s18, 0
      %p158 = por %p156, %p157
      %p159 = scmp.ne.s32.totalorder %s148, %s151
      %p160 = scmp.eq.s32.totalorder %s23, 7
      %p161 = por %p159, %p160
      %p162 = scmp.ne.s32.totalorder %s151, %s152
      %p163 = scmp.eq.s32.totalorder %s23, 0
      %p164 = por %p162, %p163
      %p165 = scmp.ne.s32.totalorder %s151, %s152
      %p166 = scmp.eq.s32.totalorder %s24, 7
      %p167 = por %p165, %p166
      %p169 = scmp.ne.s32.totalorder %s152, %s168
      %p170 = scmp.eq.s32.totalorder %s24, 0
      %p171 = por %p169, %p170
      %s172 = ssub.s32 %s25, %s37
      %p173 = scmp.eq.s32.totalorder %s172, 0
      %s175 = sadd.s32 %s174, 1
      %s176 = scalar_select %p173, %s174, %s175
      %p179 = pneg %p173
      %p180 = scmp.eq.s32.totalorder %s18, 7
      %p181 = por %p179, %p180
      %p182 = scmp.ne.s32.totalorder %s174, %s177
      %p183 = scmp.eq.s32.totalorder %s18, 0
      %p184 = por %p182, %p183
      %p185 = scmp.ne.s32.totalorder %s174, %s177
      %p186 = scmp.eq.s32.totalorder %s23, 7
      %p187 = por %p185, %p186
      %p188 = scmp.ne.s32.totalorder %s177, %s178
      %p189 = scmp.eq.s32.totalorder %s23, 0
      %p190 = por %p188, %p189
      %p191 = scmp.ne.s32.totalorder %s177, %s178
      %p192 = scmp.eq.s32.totalorder %s24, 7
      %p193 = por %p191, %p192
      %p195 = scmp.ne.s32.totalorder %s178, %s194
      %p196 = scmp.eq.s32.totalorder %s24, 0
      %p197 = por %p195, %p196
      %p198 = scmp.le.s32.totalorder 1, %s18
      %p199 = scmp.lt.s32.totalorder %s18, 9
      %p200 = pnand %p198, %p199
      %p201 = pneg %p200
      // Predicated region
      $region9: #{canny_filter.1} parent=5 // pred_check
        _
      $region10: #{canny_filter.1} parent=5 // pred_check_branch
        %203 = sbr.rel (%p200) target = $region12
      $region11: #{canny_filter.1} parent=5 // pred_region
        %s204 = ssub.s32 %s18, 1
      $region12: #{canny_filter.1} parent=5 // pred_fallthru
        _
      %p205 = scmp.lt.s32.totalorder %s18, 8
      // Predicated region
      $region13: #{canny_filter.1} parent=5 // pred_check
        %p206 = pneg %p205
      $region14: #{canny_filter.1} parent=5 // pred_check_branch
        %208 = sbr.rel (%p206) target = $region16
      $region15: #{canny_filter.1} parent=5 // pred_region
        // Predicated region
        $region17: #{canny_filter.1} parent=15 // pred_check
          %p209 = pneg %p52
        $region18: #{canny_filter.1} parent=15 // pred_check_branch
          %211 = sbr.rel (%p209) target = $region20
        $region19: #{canny_filter.1} parent=15 // pred_region
          %p212 = scmp.lt.s32.totalorder %s25, 1
          %s213 = scalar_select %p212, %s25, 1
          %p214 = scmp.lt.s32.totalorder %s26, 3
          %s215 = scalar_select %p214, %s26, 3
          %s216 = smul.addr %s215, 2
          %s217 = smul.addr %s213, 8
          %s218 = sadd.s32 %s216, %s217
          %s219 = smul.addr %s218, 8
          %s220 = scalar_lea.vmem %s0, %s219
        $region20: #{canny_filter.1} parent=15 // pred_fallthru
          _
      $region16: #{canny_filter.1} parent=5 // pred_fallthru
        _
      %p221 = scmp.le.s32.totalorder 1, %s18
      %p222 = scmp.lt.s32.totalorder %s18, 9
      %p223 = pnand %p221, %p222
      %p224 = pneg %p223
      // Predicated region
      $region21: #{canny_filter.1} parent=5 // pred_check
        _
      $region22: #{canny_filter.1} parent=5 // pred_check_branch
        %226 = sbr.rel (%p223) target = $region24
      $region23: #{canny_filter.1} parent=5 // pred_region
        %s227 = ssub.s32 %s18, 1
        %p228 = scmp.lt.s32.totalorder %s27, 1
        %s229 = scalar_select %p228, %s27, 1
        %p230 = scmp.lt.s32.totalorder %s28, 3
        %s231 = scalar_select %p230, %s28, 3
        %s232 = smul.addr %s231, 2
        %s233 = smul.addr %s229, 8
        %s234 = sadd.s32 %s232, %s233
        %s235 = smul.addr %s234, 8
        %s236 = scalar_lea.vmem %s0, %s235
        %p237 = pneg %p58
        %p238 = pneg %p55
        %p239 = pneg %p86
        %p240 = pneg %p83
        %s241 = sand.u32 %s73, 1
        %s242 = scalar_lea.sflag [#allocation3], %s241
        %s243 = sand.u32 %s73, 1
        %s244 = smul.addr %s243, 16
        %s245 = scalar_lea.vmem [#allocation2], %s244
        %p246 = pneg %p112
        %p247 = pneg %p109
        %p248 = scmp.lt.s32.totalorder %s27, 1
        %s249 = scalar_select %p248, %s27, 1
        %s250 = smul.addr %s249, 2
        %s251 = smul.addr %s250, 8
        %s252 = scalar_lea.vmem %s2, %s251
        %p253 = pneg %p138
        %p254 = pneg %p135
        %p255 = scmp.lt.s32.totalorder %s27, 1
        %s256 = scalar_select %p255, %s27, 1
        %s257 = smul.addr %s256, 2
        %s258 = smul.addr %s257, 8
        %s259 = scalar_lea.vmem %s3, %s258
        %p260 = pneg %p164
        %p261 = pneg %p161
        %s262 = sand.u32 %s23, 1
        %s263 = scalar_lea.sflag [#allocation5], %s262
        %s264 = sand.u32 %s151, 1
        %s265 = smul.addr %s264, 16
        %s266 = scalar_lea.vmem [#allocation4], %s265
        %p267 = pneg %p190
        %p268 = pneg %p187
        %s269 = sand.u32 %s23, 1
        %s270 = scalar_lea.sflag [#allocation5], %s269
        %s271 = sand.u32 %s177, 1
        %s272 = smul.addr %s271, 16
        %s273 = scalar_lea.vmem [#allocation6], %s272
        %p274 = scmp.lt.s32.totalorder %s27, 1
        %s275 = scalar_select %p274, %s27, 1
        %p276 = scmp.lt.s32.totalorder %s28, 3
        %s277 = scalar_select %p276, %s28, 3
        %s278 = smul.addr %s277, 2
        %s279 = smul.addr %s275, 8
        %s280 = sadd.s32 %s278, %s279
        %s281 = smul.addr %s280, 8
        %s282 = scalar_lea.vmem %s0, %s281
        %p283 = scmp.lt.s32.totalorder %s27, 1
        %s284 = scalar_select %p283, %s27, 1
        %s285 = smul.addr %s284, 2
        %s286 = smul.addr %s285, 8
        %s287 = scalar_lea.vmem %s2, %s286
        %p288 = scmp.lt.s32.totalorder %s27, 1
        %s289 = scalar_select %p288, %s27, 1
        %s290 = smul.addr %s289, 2
        %s291 = smul.addr %s290, 8
        %s292 = scalar_lea.vmem %s3, %s291
        %v293 = vlaneseq
        %v294 = vshrl.u32 %v293, 7
        %v295 = vadd.s32 %v294, 8
        %vm296 = vcmp.ge.s32.totalorder %v294, 1
        %vm297 = vcmp.ge.s32.totalorder %v295, 1
        %v298 = vsel %vm296, 1, 0
        %v299 = vsel %vm297, 1, 0
        %v300 = vcvt.s32.f32 %v298
        %v301 = vcvt.s32.f32 %v299
        %vm302 = vcmp.lt.s32.totalorder %v294, 15
        %vm303 = vcmp.lt.s32.totalorder %v295, 15
        %v304 = vsel %vm302, 1, 0
        %v305 = vsel %vm303, 1, 0
        %v306 = vcvt.s32.f32 %v304
        %v307 = vcvt.s32.f32 %v305
        %v308 = vlaneseq
        %v309 = vand.u32 %v308, 127
        %vm310 = vcmp.lt.s32.totalorder %v309, 16
        %v311 = vsel %vm310, 1, 0
        %v312 = vcvt.s32.f32 %v311
        %v313 = vld [vmem:[%s282] sm:$0xff]
        %v314 = vld [vmem:[%s282 + $0x8] sm:$0xff]
        %v315 = vrot.slane %v313, 7
        %v316 = vrot.slane %v314, 7
        %vm317 = vcmp.lt.s32.totalorder %v294, 1
        %v318 = vsel %vm317, %v315, %v316
        %v319 = vsel %vm317, %v316, %v315
        %v320 = vmul.f32 %v319, %v300
        %v321 = vmul.f32 %v318, %v301
        %v322 = vrot.slane %v313, 1
        %v323 = vrot.slane %v314, 1
        %vm324 = vcmp.lt.s32.totalorder %v294, 7
        %v325 = vsel %vm324, %v322, %v323
        %v326 = vsel %vm324, %v323, %v322
        %v327 = vmul.f32 %v325, %v306
        %v328 = vmul.f32 %v326, %v307
        %v329 = vadd.f32 %v320, %v327
        %v330 = vadd.f32 %v321, %v328
        %v331 = vmul.f32 %v329, 0.27406862
        %v332 = vmul.f32 %v330, 0.27406862
        %v333 = vmul.f32 %v313, 0.45186275
        %v334 = vmul.f32 %v314, 0.45186275
        %v335 = vadd.f32 %v331, %v333
        %v336 = vadd.f32 %v332, %v334
        %337 = vrot.lane.b32.xlu0 %v335, 1
        %v338 = vpop.permute.xlu0 %337
        %339 = vrot.lane.b32.xlu0 %v336, 1
        %v340 = vpop.permute.xlu0 %339
        %341 = vrot.lane.b32.xlu0 %v335, 127
        %v342 = vpop.permute.xlu0 %341
        %343 = vrot.lane.b32.xlu0 %v336, 127
        %v344 = vpop.permute.xlu0 %343
        %v345 = vadd.f32 %v338, %v342
        %v346 = vadd.f32 %v340, %v344
        %v347 = vmul.f32 %v345, 0.27406862
        %v348 = vmul.f32 %v346, 0.27406862
        %v349 = vmul.f32 %v335, 0.45186275
        %v350 = vmul.f32 %v336, 0.45186275
        %v351 = vadd.f32 %v347, %v349
        %v352 = vadd.f32 %v348, %v350
        %353 = vst [vmem:[%s245] sm:$0xff] %v351
        %354 = vst [vmem:[%s245 + $0x8] sm:$0xff] %v352
        %v355 = vmul.f32 %v351, %v312
        %v356 = vmul.f32 %v352, %v312
        %v357 = vrot.slane %v355, 7
        %v358 = vrot.slane %v356, 7
        %v359 = vsel %vm317, %v357, %v358
        %v360 = vsel %vm317, %v358, %v357
        %v361 = vmul.f32 %v360, %v300
        %v362 = vmul.f32 %v359, %v301
        %v363 = vrot.slane %v355, 1
        %v364 = vrot.slane %v356, 1
        %v365 = vsel %vm324, %v363, %v364
        %v366 = vsel %vm324, %v364, %v363
        %v367 = vmul.f32 %v365, %v306
        %v368 = vmul.f32 %v366, %v307
        %v369 = vadd.f32 %v361, %v367
        %v370 = vadd.f32 %v362, %v368
        %v371 = vmul.f32 %v369, 0.5
        %v372 = vmul.f32 %v370, 0.5
        %v373 = vadd.f32 %v371, %v355
        %v374 = vadd.f32 %v372, %v356
        %v375 = vsub.f32 %v367, %v361
        %v376 = vsub.f32 %v368, %v362
        %377 = vrot.lane.b32.xlu0 %v373, 127
        %v378 = vpop.permute.xlu0 %377
        %379 = vrot.lane.b32.xlu0 %v374, 127
        %v380 = vpop.permute.xlu0 %379
        %381 = vrot.lane.b32.xlu0 %v373, 1
        %v382 = vpop.permute.xlu0 %381
        %383 = vrot.lane.b32.xlu0 %v374, 1
        %v384 = vpop.permute.xlu0 %383
        %v385 = vsub.f32 %v378, %v382
        %v386 = vsub.f32 %v380, %v384
        %387 = vrot.lane.b32.xlu0 %v375, 1
        %v388 = vpop.permute.xlu0 %387
        %389 = vrot.lane.b32.xlu0 %v376, 1
        %v390 = vpop.permute.xlu0 %389
        %391 = vrot.lane.b32.xlu0 %v375, 127
        %v392 = vpop.permute.xlu0 %391
        %393 = vrot.lane.b32.xlu0 %v376, 127
        %v394 = vpop.permute.xlu0 %393
        %v395 = vadd.f32 %v388, %v392
        %v396 = vadd.f32 %v390, %v394
        %v397 = vmul.f32 %v395, 0.5
        %v398 = vmul.f32 %v396, 0.5
        %v399 = vadd.f32 %v397, %v375
        %v400 = vadd.f32 %v398, %v376
        %p401 = scmp.eq.s32.totalorder %s28, 0
        // Predicated region
        $region25: #{canny_filter.1} parent=23 // pred_check
          %p402 = pneg %p401
        $region26: #{canny_filter.1} parent=23 // pred_check_branch
          %404 = sbr.rel (%p402) target = $region28
        $region27: #{canny_filter.1} parent=23 // pred_region
          %405 = vst [vmem:[%s287] sm:$0xff] %v385
          %406 = vst [vmem:[%s287 + $0x8] sm:$0xff] %v386
          %407 = vst [vmem:[%s292] sm:$0xff] %v399
          %408 = vst [vmem:[%s292 + $0x8] sm:$0xff] %v400
        $region28: #{canny_filter.1} parent=23 // pred_fallthru
          _
        %p409 = scmp.gt.s32.totalorder %s28, 0
        // Predicated region
        $region29: #{canny_filter.1} parent=23 // pred_check
          %p410 = pneg %p409
        $region30: #{canny_filter.1} parent=23 // pred_check_branch
          %412 = sbr.rel (%p410) target = $region32
        $region31: #{canny_filter.1} parent=23 // pred_region
          %v413 = vld [vmem:[%s287] sm:$0xff]
          %v414 = vld [vmem:[%s287 + $0x8] sm:$0xff]
          %v415 = vadd.f32 %v413, %v385
          %v416 = vadd.f32 %v414, %v386
          %417 = vst [vmem:[%s287] sm:$0xff] %v415
          %418 = vst [vmem:[%s287 + $0x8] sm:$0xff] %v416
          %v419 = vld [vmem:[%s292] sm:$0xff]
          %v420 = vld [vmem:[%s292 + $0x8] sm:$0xff]
          %v421 = vadd.f32 %v419, %v399
          %v422 = vadd.f32 %v420, %v400
          %423 = vst [vmem:[%s292] sm:$0xff] %v421
          %424 = vst [vmem:[%s292 + $0x8] sm:$0xff] %v422
        $region32: #{canny_filter.1} parent=23 // pred_fallthru
          _
        %p425 = scmp.eq.s32.totalorder %s28, 3
        // Predicated region
        $region33: #{canny_filter.1} parent=23 // pred_check
          %p426 = pneg %p425
        $region34: #{canny_filter.1} parent=23 // pred_check_branch
          %428 = sbr.rel (%p426) target = $region36
        $region35: #{canny_filter.1} parent=23 // pred_region
          %v429 = vld [vmem:[%s287] sm:$0xff]
          %v430 = vld [vmem:[%s287 + $0x8] sm:$0xff]
          %v431 = vmul.f32 %v429, 0.25
          %v432 = vmul.f32 %v430, 0.25
          %v433 = vld [vmem:[%s292] sm:$0xff]
          %v434 = vld [vmem:[%s292 + $0x8] sm:$0xff]
          %v435 = vmul.f32 %v433, 0.25
          %v436 = vmul.f32 %v434, 0.25
          %437 = vst [vmem:[%s287] sm:$0xff] %v431
          %438 = vst [vmem:[%s287 + $0x8] sm:$0xff] %v432
          %439 = vst [vmem:[%s292] sm:$0xff] %v435
          %440 = vst [vmem:[%s292 + $0x8] sm:$0xff] %v436
          %v441 = vmul.f32 %v431, %v431
          %v442 = vmul.f32 %v432, %v432
          %v443 = vmul.f32 %v435, %v435
          %v444 = vmul.f32 %v436, %v436
          %v445 = vadd.f32 %v441, %v443
          %v446 = vadd.f32 %v442, %v444
          %v447 = vrsqrt.pop %v445
          %v448 = vmul.f32 %v447, %v445
          %v449 = vmul.f32 %v448, %v447
          %v450 = vmul.f32 0.5, %v449
          %v451 = vsub.f32 1.5, %v450
          %v452 = vmul.f32 %v447, %v451
          %v453 = vmul.f32 %v445, %v452
          %vm454 = vcmp.eq.f32.partialorder %v445, inf
          %v455 = vsel %vm454, %v445, %v453
          %vm456 = vcmp.eq.f32.partialorder %v445, 0.0
          %v457 = vand.u32 %v445, 2147483648
          %v458 = vsel %vm456, %v457, %v455
          %v459 = vrsqrt.pop %v446
          %v460 = vmul.f32 %v459, %v446
          %v461 = vmul.f32 %v460, %v459
          %v462 = vmul.f32 0.5, %v461
          %v463 = vsub.f32 1.5, %v462
          %v464 = vmul.f32 %v459, %v463
          %v465 = vmul.f32 %v446, %v464
          %vm466 = vcmp.eq.f32.partialorder %v446, inf
          %v467 = vsel %vm466, %v446, %v465
          %vm468 = vcmp.eq.f32.partialorder %v446, 0.0
          %v469 = vand.u32 %v446, 2147483648
          %v470 = vsel %vm468, %v469, %v467
          %471 = vst [vmem:[%s266] sm:$0xff] %v458
          %472 = vst [vmem:[%s266 + $0x8] sm:$0xff] %v470
          %v473 = vmul.f32 %v458, %v312
          %v474 = vmul.f32 %v470, %v312
          %v475 = vrot.slane %v473, 7
          %v476 = vrot.slane %v474, 7
          %v477 = vsel %vm317, %v475, %v476
          %v478 = vsel %vm317, %v476, %v475
          %v479 = vmul.f32 %v478, %v300
          %v480 = vmul.f32 %v477, %v301
          %v481 = vrot.slane %v473, 1
          %v482 = vrot.slane %v474, 1
          %v483 = vsel %vm324, %v481, %v482
          %v484 = vsel %vm324, %v482, %v481
          %v485 = vmul.f32 %v483, %v306
          %v486 = vmul.f32 %v484, %v307
          %487 = vrot.lane.b32.xlu0 %v473, 127
          %v488 = vpop.permute.xlu0 %487
          %489 = vrot.lane.b32.xlu0 %v474, 127
          %v490 = vpop.permute.xlu0 %489
          %491 = vrot.lane.b32.xlu0 %v473, 1
          %v492 = vpop.permute.xlu0 %491
          %493 = vrot.lane.b32.xlu0 %v474, 1
          %v494 = vpop.permute.xlu0 %493
          %v495 = vmax.f32 %v488, %v492
          %v496 = vmax.f32 %v490, %v494
          %497 = vrot.lane.b32.xlu0 %v479, 127
          %v498 = vpop.permute.xlu0 %497
          %499 = vrot.lane.b32.xlu0 %v480, 127
          %v500 = vpop.permute.xlu0 %499
          %501 = vrot.lane.b32.xlu0 %v485, 1
          %v502 = vpop.permute.xlu0 %501
          %503 = vrot.lane.b32.xlu0 %v486, 1
          %v504 = vpop.permute.xlu0 %503
          %v505 = vmax.f32 %v498, %v502
          %v506 = vmax.f32 %v500, %v504
          %507 = vrot.lane.b32.xlu0 %v479, 1
          %v508 = vpop.permute.xlu0 %507
          %509 = vrot.lane.b32.xlu0 %v480, 1
          %v510 = vpop.permute.xlu0 %509
          %511 = vrot.lane.b32.xlu0 %v485, 127
          %v512 = vpop.permute.xlu0 %511
          %513 = vrot.lane.b32.xlu0 %v486, 127
          %v514 = vpop.permute.xlu0 %513
          %v515 = vmax.f32 %v508, %v512
          %v516 = vmax.f32 %v510, %v514
          %v517 = vmax.f32 %v479, %v485
          %v518 = vmax.f32 %v480, %v486
          %v519 = vand.u32 2147483647, %v431
          %v520 = vand.u32 2147483647, %v432
          %v521 = vand.u32 2147483647, %v435
          %v522 = vand.u32 2147483647, %v436
          %v523 = vmul.f32 %v431, %v435
          %v524 = vmul.f32 %v432, %v436
          %vm525 = vcmp.gt.f32.partialorder %v523, 0.0
          %vm526 = vcmp.gt.f32.partialorder %v524, 0.0
          %v527 = vmul.f32 %v519, 0.19891237
          %v528 = vmul.f32 %v520, 0.19891237
          %v529 = vmul.f32 %v519, 0.6681786
          %v530 = vmul.f32 %v520, 0.6681786
          %v531 = vmul.f32 %v519, 1.4966058
          %v532 = vmul.f32 %v520, 1.4966058
          %v533 = vmul.f32 %v519, 5.0273395
          %v534 = vmul.f32 %v520, 5.0273395
          %vm535 = vcmp.ge.f32.partialorder %v521, %v527
          %vm536 = vcmp.ge.f32.partialorder %v522, %v528
          %vm537 = vcmp.lt.f32.partialorder %v521, %v529
          %vm538 = vcmp.lt.f32.partialorder %v522, %v530
          %vm539 = vmand %vm535, %vm537
          %vm540 = vmand %vm536, %vm538
          %vm541 = vcmp.ge.f32.partialorder %v521, %v531
          %vm542 = vcmp.ge.f32.partialorder %v522, %v532
          %vm543 = vcmp.lt.f32.partialorder %v521, %v533
          %vm544 = vcmp.lt.f32.partialorder %v522, %v534
          %vm545 = vmand %vm541, %vm543
          %vm546 = vmand %vm542, %vm544
          %vm547 = vcmp.lt.f32.partialorder %v521, %v527
          %vm548 = vcmp.lt.f32.partialorder %v522, %v528
          %vm549 = vcmp.ge.f32.partialorder %v521, %v533
          %vm550 = vcmp.ge.f32.partialorder %v522, %v534
          %vm551 = vmor %vm547, %vm549
          %vm552 = vmor %vm548, %vm550
          %vm553 = vcmp.le.f32.partialorder %v473, %v495
          %vm554 = vcmp.le.f32.partialorder %v474, %v496
          %vm555 = vmand %vm551, %vm553
          %vm556 = vmand %vm552, %vm554
          %vm557 = vmand %vm539, %vm525
          %vm558 = vmand %vm540, %vm526
          %vm559 = vmxor %vm525, 1
          %vm560 = vmxor %vm526, 1
          %vm561 = vmand %vm545, %vm559
          %vm562 = vmand %vm546, %vm560
          %vm563 = vmor %vm557, %vm561
          %vm564 = vmor %vm558, %vm562
          %vm565 = vcmp.le.f32.partialorder %v473, %v505
          %vm566 = vcmp.le.f32.partialorder %v474, %v506
          %vm567 = vmand %vm563, %vm565
          %vm568 = vmand %vm564, %vm566
          %vm569 = vmor %vm555, %vm567
          %vm570 = vmor %vm556, %vm568
          %vm571 = vcmp.ge.f32.partialorder %v521, %v529
          %vm572 = vcmp.ge.f32.partialorder %v522, %v530
          %vm573 = vcmp.lt.f32.partialorder %v521, %v531
          %vm574 = vcmp.lt.f32.partialorder %v522, %v532
          %vm575 = vmand %vm571, %vm573
          %vm576 = vmand %vm572, %vm574
          %vm577 = vcmp.le.f32.partialorder %v473, %v517
          %vm578 = vcmp.le.f32.partialorder %v474, %v518
          %vm579 = vmand %vm575, %vm577
          %vm580 = vmand %vm576, %vm578
          %vm581 = vmor %vm569, %vm579
          %vm582 = vmor %vm570, %vm580
          %vm583 = vmand %vm539, %vm559
          %vm584 = vmand %vm540, %vm560
          %vm585 = vmand %vm545, %vm525
          %vm586 = vmand %vm546, %vm526
          %vm587 = vmor %vm583, %vm585
          %vm588 = vmor %vm584, %vm586
          %vm589 = vcmp.le.f32.partialorder %v473, %v515
          %vm590 = vcmp.le.f32.partialorder %v474, %v516
          %vm591 = vmand %vm587, %vm589
          %vm592 = vmand %vm588, %vm590
          %vm593 = vmor %vm581, %vm591
          %vm594 = vmor %vm582, %vm592
          %v595 = vsel %vm593, 0.0, %v458
          %v596 = vsel %vm594, 0.0, %v470
          %597 = vst [vmem:[%s273] sm:$0xff] %v595
          %598 = vst [vmem:[%s273 + $0x8] sm:$0xff] %v596
        $region36: #{canny_filter.1} parent=23 // pred_fallthru
          _
        %s599 = sand.u32 %s73, 1
        %s600 = scalar_lea.sflag [#allocation3], %s599
        %s601 = sand.u32 %s73, 1
        %s602 = smul.addr %s601, 16
        %s603 = scalar_lea.vmem [#allocation2], %s602
        %p604 = scmp.lt.s32.totalorder %s27, 1
        %s605 = scalar_select %p604, %s27, 1
        %s606 = smul.addr %s605, 2
        %s607 = smul.addr %s606, 8
        %s608 = scalar_lea.vmem %s2, %s607
        %p609 = scmp.lt.s32.totalorder %s27, 1
        %s610 = scalar_select %p609, %s27, 1
        %s611 = smul.addr %s610, 2
        %s612 = smul.addr %s611, 8
        %s613 = scalar_lea.vmem %s3, %s612
        %s614 = sand.u32 %s23, 1
        %s615 = scalar_lea.sflag [#allocation5], %s614
        %s616 = sand.u32 %s151, 1
        %s617 = smul.addr %s616, 16
        %s618 = scalar_lea.vmem [#allocation4], %s617
        %s619 = sand.u32 %s23, 1
        %s620 = scalar_lea.sflag [#allocation5], %s619
        %s621 = sand.u32 %s177, 1
        %s622 = smul.addr %s621, 16
        %s623 = scalar_lea.vmem [#allocation6], %s622
        // Predicated region
        $region37: #{canny_filter.1} parent=23 // pred_check
          %p624 = pneg %p83
        $region38: #{canny_filter.1} parent=23 // pred_check_branch
          %626 = sbr.rel (%p624) target = $region40
        $region39: #{canny_filter.1} parent=23 // pred_region
          %628 = vsyncadd %s600, 0
          %s629 = smul.addr %s28, 2
          %s630 = smul.addr %s27, 8
          %s631 = sadd.s32 %s629, %s630
          %s632 = smul.addr %s631, 8
          %s633 = scalar_lea.hbm %s1, %s632
          %s634 = sshll.u32 %s603, 4
          %s635 = int_to_ptr.vmem [resolvable:$true] %s634
          %s636 = sshll.u32 %s633, 4
          %s637 = int_to_ptr.hbm [resolvable:$true] %s636
          %642 = dma.vmem_to_hbm [thread:$0]  %s635, 256, %s637, %s600, 128, 128, 8
        $region40: #{canny_filter.1} parent=23 // pred_fallthru
          _
        // Predicated region
        $region41: #{canny_filter.1} parent=23 // pred_check
          %p643 = pneg %p109
        $region42: #{canny_filter.1} parent=23 // pred_check_branch
          %645 = sbr.rel (%p643) target = $region44
        $region43: #{canny_filter.1} parent=23 // pred_region
          _
        $region44: #{canny_filter.1} parent=23 // pred_fallthru
          _
        // Predicated region
        $region45: #{canny_filter.1} parent=23 // pred_check
          %p646 = pneg %p135
        $region46: #{canny_filter.1} parent=23 // pred_check_branch
          %648 = sbr.rel (%p646) target = $region48
        $region47: #{canny_filter.1} parent=23 // pred_region
          _
        $region48: #{canny_filter.1} parent=23 // pred_fallthru
          _
        // Predicated region
        $region49: #{canny_filter.1} parent=23 // pred_check
          %p649 = pneg %p161
        $region50: #{canny_filter.1} parent=23 // pred_check_branch
          %651 = sbr.rel (%p649) target = $region52
        $region51: #{canny_filter.1} parent=23 // pred_region
          %653 = vsyncadd %s615, 0
          %s654 = smul.addr %s27, 2
          %s655 = smul.addr %s654, 8
          %s656 = scalar_lea.hbm %s4, %s655
          %s657 = sshll.u32 %s618, 4
          %s658 = int_to_ptr.vmem [resolvable:$true] %s657
          %s659 = sshll.u32 %s656, 4
          %s660 = int_to_ptr.hbm [resolvable:$true] %s659
          %665 = dma.vmem_to_hbm [thread:$0]  %s658, 256, %s660, %s615, 128, 128, 8
        $region52: #{canny_filter.1} parent=23 // pred_fallthru
          _
        // Predicated region
        $region53: #{canny_filter.1} parent=23 // pred_check
          %p666 = pneg %p187
        $region54: #{canny_filter.1} parent=23 // pred_check_branch
          %668 = sbr.rel (%p666) target = $region56
        $region55: #{canny_filter.1} parent=23 // pred_region
          %670 = vsyncadd %s620, 0
          %s671 = smul.addr %s27, 2
          %s672 = smul.addr %s671, 8
          %s673 = scalar_lea.hbm %s5, %s672
          %s674 = sshll.u32 %s623, 4
          %s675 = int_to_ptr.vmem [resolvable:$true] %s674
          %s676 = sshll.u32 %s673, 4
          %s677 = int_to_ptr.hbm [resolvable:$true] %s676
          %682 = dma.vmem_to_hbm [thread:$0]  %s675, 256, %s677, %s620, 128, 128, 8
        $region56: #{canny_filter.1} parent=23 // pred_fallthru
          _
      $region24: #{canny_filter.1} parent=5 // pred_fallthru
        _
      %p683 = scmp.le.s32.totalorder 2, %s18
      // Predicated region
      $region57: #{canny_filter.1} parent=5 // pred_check
        %p684 = pneg %p683
      $region58: #{canny_filter.1} parent=5 // pred_check_branch
        %686 = sbr.rel (%p684) target = $region60
      $region59: #{canny_filter.1} parent=5 // pred_region
        %s687 = ssub.s32 %s18, 2
        // Predicated region
        $region61: #{canny_filter.1} parent=59 // pred_check
          %p688 = pneg %p89
        $region62: #{canny_filter.1} parent=59 // pred_check_branch
          %690 = sbr.rel (%p688) target = $region64
        $region63: #{canny_filter.1} parent=59 // pred_region
          %s691 = sand.u32 %s74, 1
          %s692 = scalar_lea.sflag [#allocation3], %s691
          %s693 = sand.u32 %s74, 1
          %s694 = smul.addr %s693, 16
          %s695 = scalar_lea.vmem [#allocation2], %s694
          %697 = dma.done %s692, 256
        $region64: #{canny_filter.1} parent=59 // pred_fallthru
          _
        // Predicated region
        $region65: #{canny_filter.1} parent=59 // pred_check
          %p698 = pneg %p115
        $region66: #{canny_filter.1} parent=59 // pred_check_branch
          %700 = sbr.rel (%p698) target = $region68
        $region67: #{canny_filter.1} parent=59 // pred_region
          %p701 = scmp.lt.s32.totalorder %s29, 1
          %s702 = scalar_select %p701, %s29, 1
          %s703 = smul.addr %s702, 2
          %s704 = smul.addr %s703, 8
          %s705 = scalar_lea.vmem %s2, %s704
        $region68: #{canny_filter.1} parent=59 // pred_fallthru
          _
        // Predicated region
        $region69: #{canny_filter.1} parent=59 // pred_check
          %p706 = pneg %p141
        $region70: #{canny_filter.1} parent=59 // pred_check_branch
          %708 = sbr.rel (%p706) target = $region72
        $region71: #{canny_filter.1} parent=59 // pred_region
          %p709 = scmp.lt.s32.totalorder %s29, 1
          %s710 = scalar_select %p709, %s29, 1
          %s711 = smul.addr %s710, 2
          %s712 = smul.addr %s711, 8
          %s713 = scalar_lea.vmem %s3, %s712
        $region72: #{canny_filter.1} parent=59 // pred_fallthru
          _
        // Predicated region
        $region73: #{canny_filter.1} parent=59 // pred_check
          %p714 = pneg %p167
        $region74: #{canny_filter.1} parent=59 // pred_check_branch
          %716 = sbr.rel (%p714) target = $region76
        $region75: #{canny_filter.1} parent=59 // pred_region
          %s717 = sand.u32 %s24, 1
          %s718 = scalar_lea.sflag [#allocation5], %s717
          %s719 = sand.u32 %s152, 1
          %s720 = smul.addr %s719, 16
          %s721 = scalar_lea.vmem [#allocation4], %s720
          %723 = dma.done %s718, 256
        $region76: #{canny_filter.1} parent=59 // pred_fallthru
          _
        // Predicated region
        $region77: #{canny_filter.1} parent=59 // pred_check
          %p724 = pneg %p193
        $region78: #{canny_filter.1} parent=59 // pred_check_branch
          %726 = sbr.rel (%p724) target = $region80
        $region79: #{canny_filter.1} parent=59 // pred_region
          %s727 = sand.u32 %s24, 1
          %s728 = scalar_lea.sflag [#allocation5], %s727
          %s729 = sand.u32 %s178, 1
          %s730 = smul.addr %s729, 16
          %s731 = scalar_lea.vmem [#allocation6], %s730
          %733 = dma.done %s728, 256
        $region80: #{canny_filter.1} parent=59 // pred_fallthru
          _
      $region60: #{canny_filter.1} parent=5 // pred_fallthru
        _
    $region6: #{canny_filter.1} parent=1 // loop_footer
      %s22 = sadd.s32 1, %s18
    $region7: #{canny_filter.1} parent=1 // loop_footer_branch
      %17 = sbr.rel target = $region3
    $region8: #{canny_filter.1} parent=1 // loop_exit
      _
    %734 = vsyncpa [#allocation3], 1
    %s735 = scalar_lea.sflag [#allocation3], 1
    %736 = vsyncpa %s735, 1
    %737 = vsyncpa [#allocation5], 1
    %s738 = scalar_lea.sflag [#allocation5], 1
    %739 = vsyncpa %s738, 1

</llo_original>
